<compile_context>
chip_gen: v6e
topology: v6e:2x2x1
jax: 0.10.0
libtpu: 0.0.40
codegen_flags: <defaults>
</compile_context>

<pallas_src>
import functools

import jax
import jax.numpy as jnp
from jax import lax
from jax.experimental import pallas as pl
from jax.experimental.pallas import tpu as pltpu


def _round_up(x, m):
    return ((x + m - 1) // m) * m


# ----------------------------------------------------------------------------
# Kernel 1 (parallel): input projection  xproj = x @ Wx + bias   over T*B rows.
# ----------------------------------------------------------------------------
def xproj_kernel(x_ref, wx_ref, b_ref, o_ref):
    acc = jnp.dot(x_ref[...].astype(wx_ref.dtype), wx_ref[...],
                  preferred_element_type=jnp.float32)
    o_ref[...] = (acc + b_ref[...].astype(jnp.float32)).astype(o_ref.dtype)


# ----------------------------------------------------------------------------
# Kernel 2 (sequential): recurrence, TT timesteps per grid step.
#   fused_t = xproj_t + h_slab @ Wh        (rows >= H of Wh are zero)
#   h_slab <- fused_t                       (only first H lanes matter next step)
# ----------------------------------------------------------------------------
def rnn_recurrent_kernel(xproj_ref,   # (TT, TB, F) per-block precomputed x-proj
                         h0_ref,      # (TB, F)     initial hidden slab
                         wh_ref,      # (F, F)      fused hidden weights (resident)
                         out_ref,     # (TT, TB, F) output slab [newh | out | 0]
                         h_carry,     # VMEM scratch (TB, F) f32
                         *, tt: int):
    t_blk = pl.program_id(1)

    @pl.when(t_blk == 0)
    def _():
        h_carry[...] = h0_ref[...].astype(jnp.float32)

    cd = wh_ref.dtype   # compute dtype follows packed weights (f32 or bf16)

    def step(i, h):
        fused = xproj_ref[i].astype(jnp.float32) + jnp.dot(
            h.astype(cd), wh_ref[...], preferred_element_type=jnp.float32)
        out_ref[i] = fused.astype(out_ref.dtype)
        return fused

    h_carry[...] = lax.fori_loop(0, tt, step, h_carry[...], unroll=True)


# ----------------------------------------------------------------------------
# Parameter init (matches the nn.Linear shapes of the torch module).
# ----------------------------------------------------------------------------
def init_rnn_params(key, input_size, hidden_size, output_size, dtype=jnp.float32):
    ks = jax.random.split(key, 8)

    def linear(kw, kb, out_f, in_f):
        bound = 1.0 / jnp.sqrt(jnp.array(in_f, jnp.float32))
        w = jax.random.uniform(kw, (out_f, in_f), dtype, -bound, bound)
        b = jax.random.uniform(kb, (out_f,), dtype, -bound, bound)
        return w, b

    w_i2h, b_i2h = linear(ks[0], ks[1], hidden_size, input_size + hidden_size)
    w_i2o, b_i2o = linear(ks[2], ks[3], output_size, input_size + hidden_size)
    w_h2h, b_h2h = linear(ks[4], ks[5], hidden_size, hidden_size)
    w_o2o, b_o2o = linear(ks[6], ks[7], output_size, hidden_size + output_size)
    return dict(i2h=(w_i2h, b_i2h), i2o=(w_i2o, b_i2o),
                h2h=(w_h2h, b_h2h), o2o=(w_o2o, b_o2o))


# ----------------------------------------------------------------------------
# One-time parameter packing: fold the 4 Linears into 2 lane-fused matmuls.
#   newh = x @ Wxh + h @ Whh'   (+ folded bias)
#   out  = x @ Wxo + h @ Who    (+ folded bias)
# lane-fused into a 128-multiple slab [hidden | output | pad].
# dtype=jnp.bfloat16 is recommended on v6e/v7x (halves resident weight VMEM);
# accumulation is always f32 in-kernel.
# ----------------------------------------------------------------------------
def pack_rnn_params(params, input_size, hidden_size, output_size,
                    lane_multiple=128, dtype=jnp.float32):
    f32 = jnp.float32
    w_i2h, b_i2h = params["i2h"]
    w_i2o, b_i2o = params["i2o"]
    w_h2h, b_h2h = params["h2h"]
    w_o2o, b_o2o = params["o2o"]

    # Split at the cat() boundaries and transpose to (in, out).
    wih_x = w_i2h[:, :input_size].T.astype(f32)     # (I, H)
    wih_h = w_i2h[:, input_size:].T.astype(f32)     # (H, H)
    wio_x = w_i2o[:, :input_size].T.astype(f32)     # (I, O)
    wio_h = w_i2o[:, input_size:].T.astype(f32)     # (H, O)
    whh = w_h2h.T.astype(f32)                       # (H, H)
    woo_h = w_o2o[:, :hidden_size].T.astype(f32)    # (H, O)
    woo_o = w_o2o[:, hidden_size:].T.astype(f32)    # (O, O)

    # newh = h2h(i2h(cat(x,h)))  ==  x@Wxh + h@Whh_f + bh
    Wxh = wih_x @ whh                                   # (I, H)
    Whh_f = wih_h @ whh                                 # (H, H)
    bh = b_i2h.astype(f32) @ whh + b_h2h.astype(f32)    # (H,)

    # out = o2o(cat(newh, i2o(cat(x,h))))  ==  x@Wxo + h@Who + bo
    Wxo = Wxh @ woo_h + wio_x @ woo_o                   # (I, O)
    Who = Whh_f @ woo_h + wio_h @ woo_o                 # (H, O)
    bo = bh @ woo_h + b_i2o.astype(f32) @ woo_o + b_o2o.astype(f32)  # (O,)

    used = hidden_size + output_size
    F = _round_up(used, lane_multiple)

    wx = jnp.zeros((input_size, F), f32)
    wx = wx.at[:, :hidden_size].set(Wxh).at[:, hidden_size:used].set(Wxo)

    wh = jnp.zeros((F, F), f32)
    wh = wh.at[:hidden_size, :hidden_size].set(Whh_f)
    wh = wh.at[:hidden_size, hidden_size:used].set(Who)

    bias = jnp.zeros((1, F), f32)
    bias = bias.at[0, :hidden_size].set(bh).at[0, hidden_size:used].set(bo)

    return dict(
        wx=wx.astype(dtype), wh=wh.astype(dtype), bias=bias,  # bias stays f32
        input_size=input_size, hidden_size=hidden_size,
        output_size=output_size, fused_width=F,
    )


# ----------------------------------------------------------------------------
# Sequence forward.
# ----------------------------------------------------------------------------
def rnn_forward_seq(xs, hidden0, packed, *, training=False, drop_p=0.5, seed=0):
    T, B, input_size = xs.shape
    H = packed["hidden_size"]
    O = packed["output_size"]
    F = packed["fused_width"]
    wx, wh, bias = packed["wx"], packed["wh"], packed["bias"]

    if training:
        assert 0.0 <= drop_p < 1.0, "drop_p must be in [0, 1) when training"

    # ---- Phase 1: parallel input projection over all T*B rows -------------
    R = T * B
    TM = min(512, _round_up(R, 8))
    R_pad = _round_up(R, TM)
    x2d = xs.reshape(R, input_size)
    if R_pad != R:
        x2d = jnp.pad(x2d, ((0, R_pad - R), (0, 0)))

    xproj2d = pl.pallas_call(
        xproj_kernel,
        out_shape=jax.ShapeDtypeStruct((R_pad, F), jnp.float32),
        grid_spec=pltpu.PrefetchScalarGridSpec(
            num_scalar_prefetch=0,
            grid=(R_pad // TM,),
            in_specs=[
                pl.BlockSpec((TM, input_size), lambda i: (i, 0)),
                pl.BlockSpec((input_size, F), lambda i: (0, 0)),   # wx resident
                pl.BlockSpec((1, F), lambda i: (0, 0)),            # bias resident
            ],
            out_specs=pl.BlockSpec((TM, F), lambda i: (i, 0)),
        ),
        compiler_params=pltpu.CompilerParams(dimension_semantics=("parallel",)),
    )(x2d, wx, bias)
    xproj = xproj2d[:R].reshape(T, B, F)

    # ---- Phase 2: sequential recurrence, TT timesteps per grid iteration --
    TT = min(T, 32)
    T_pad = _round_up(T, TT)
    if T_pad != T:
        xproj = jnp.pad(xproj, ((0, T_pad - T), (0, 0), (0, 0)))

    # Batch tiling: 2 batch blocks (parallel -> both v7x TensorCores) when the
    # batch is big enough; otherwise a single block.
    NB = 2 if (B >= 16 and B % 16 == 0) else 1
    TB = B // NB

    h0_slab = jnp.zeros((B, F), jnp.float32).at[:, :H].set(
        hidden0.astype(jnp.float32))

    # Explicit VMEM budget (matters once F grows; v7x only has 64 MiB).
    blk = TT * TB * F * 4
    vmem_est = (wh.size * wh.dtype.itemsize + 2 * TB * F * 4
                + 2 * blk + 2 * blk + TB * F * 4 + (4 << 20))
    vmem_limit = int(min(max(vmem_est, 8 << 20), 64 << 20))

    kernel = functools.partial(rnn_recurrent_kernel, tt=TT)

    slab = pl.pallas_call(
        kernel,
        out_shape=jax.ShapeDtypeStruct((T_pad, B, F), jnp.float32),
        grid_spec=pltpu.PrefetchScalarGridSpec(
            num_scalar_prefetch=0,
            grid=(NB, T_pad // TT),
            in_specs=[
                pl.BlockSpec((TT, TB, F), lambda b, t: (t, b, 0)),  # xproj stream
                pl.BlockSpec((TB, F), lambda b, t: (b, 0)),         # h0 slab
                pl.BlockSpec((F, F), lambda b, t: (0, 0)),          # wh resident
            ],
            out_specs=pl.BlockSpec((TT, TB, F), lambda b, t: (t, b, 0)),
            scratch_shapes=[pltpu.VMEM((TB, F), jnp.float32)],      # hidden carry
        ),
        compiler_params=pltpu.CompilerParams(
            dimension_semantics=("parallel", "arbitrary"),
            vmem_limit_bytes=vmem_limit),
    )(xproj, h0_slab, wh)

    hiddens = slab[:T, :, :H]
    outputs = slab[:T, :, H:H + O]

    if training and drop_p > 0.0:
        # nn.Dropout(p) acts only on the returned output (never fed back into
        # the recurrence), so it is applied here with jax.random.
        # TODO(synk): cannot bit-match torch's RNG stream; Dropout semantics
        # (zero w.p. p, scale kept values by 1/(1-p)) are preserved.
        keep = jax.random.bernoulli(jax.random.PRNGKey(seed), 1.0 - drop_p,
                                    outputs.shape)
        outputs = jnp.where(keep, outputs / (1.0 - drop_p),
                            jnp.zeros_like(outputs))

    return outputs.astype(xs.dtype), hiddens.astype(xs.dtype)


# Single-step API matching the torch module's forward(input, hidden).
def rnn_forward(x, hidden, packed, *, training=False, drop_p=0.5, seed=0):
    outs, hids = rnn_forward_seq(x[None], hidden, packed,
                                 training=training, drop_p=drop_p, seed=seed)
    return outs[0], hids[0]


# ----------------------------------------------------------------------------
# Pure-JAX reference (eval mode, dropout = identity), un-fused math.
# ----------------------------------------------------------------------------
def rnn_forward_ref(x, hidden, params):
    w_i2h, b_i2h = params["i2h"]
    w_i2o, b_i2o = params["i2o"]
    w_h2h, b_h2h = params["h2h"]
    w_o2o, b_o2o = params["o2o"]
    ic = jnp.concatenate([x, hidden], axis=1)
    hid = ic @ w_i2h.T + b_i2h
    hid = hid @ w_h2h.T + b_h2h
    out = ic @ w_i2o.T + b_i2o
    oc = jnp.concatenate([hid, out], axis=1)
    out = oc @ w_o2o.T + b_o2o
    return out, hid


if __name__ == "__main__":
    B = 8            # fills the f32 sublane tile
    T = 8
    input_size = 16
    hidden_size = 32
    output_size = 24

    key = jax.random.PRNGKey(0)
    kx, kp = jax.random.split(key, 2)

    xs = jax.random.normal(kx, (T, B, input_size), dtype=jnp.float32)
    h0 = jnp.zeros((B, hidden_size), dtype=jnp.float32)   # init_hidden()
    params = init_rnn_params(kp, input_size, hidden_size, output_size)

    # One-time fold/pack (hoisted out of the per-step path).
    packed = pack_rnn_params(params, input_size, hidden_size, output_size)

    # ---- sequence run (eval mode; dropout identity, deterministic) --------
    outs, hids = rnn_forward_seq(xs, h0, packed, training=False)
    jax.block_until_ready((outs, hids))

    # reference: step the un-fused math through the sequence
    outs_ref, hids_ref, h = [], [], h0
    for t in range(T):
        o, h = rnn_forward_ref(xs[t], h, params)
        outs_ref.append(o)
        hids_ref.append(h)
    outs_ref = jnp.stack(outs_ref)
    hids_ref = jnp.stack(hids_ref)

    assert outs.shape == (T, B, output_size)
    assert hids.shape == (T, B, hidden_size)
    assert jnp.allclose(outs, outs_ref, atol=1e-4, rtol=1e-4)
    assert jnp.allclose(hids, hids_ref, atol=1e-4, rtol=1e-4)

    # ---- single-step API (matches module.forward(input, hidden)) ----------
    out1, h1 = rnn_forward(xs[0], h0, packed, training=False)
    jax.block_until_ready((out1, h1))
    o_ref, h_ref = rnn_forward_ref(xs[0], h0, params)
    assert jnp.allclose(out1, o_ref, atol=1e-4, rtol=1e-4)
    assert jnp.allclose(h1, h_ref, atol=1e-4, rtol=1e-4)

    # ---- exercise the training-mode dropout path (wrapper-side RNG) -------
    outs_tr, hids_tr = rnn_forward_seq(xs, h0, packed, training=True,
                                       drop_p=0.5, seed=123)
    jax.block_until_ready((outs_tr, hids_tr))
    # Hidden path is unaffected by dropout.
    assert jnp.allclose(hids_tr, hids_ref, atol=1e-4, rtol=1e-4)

    print("KERNEL_OK")
</pallas_src>

<mosaic_0001>
module attributes {stable_mosaic.version = 11 : i64} {
  func.func @xproj_kernel(%arg0: i32, %arg1: memref<64x16xf32, #tpu.memory_space<vmem>>, %arg2: memref<16x128xf32, #tpu.memory_space<vmem>>, %arg3: memref<1x128xf32, #tpu.memory_space<vmem>>, %arg4: memref<64x128xf32, #tpu.memory_space<vmem>>) attributes {dimension_semantics = [#tpu.dimension_semantics<parallel>], iteration_bounds = array<i64: 1>, scalar_prefetch = 0 : i64, scratch_operands = 0 : i64, tpu.core_type = #tpu.core_type<tc>, window_params = [{transform_indices = @transform_0, window_bounds = array<i64: 64, 16>}, {pipeline_mode = #tpu.pipeline_mode<synchronous>, transform_indices = @transform_1, window_bounds = array<i64: 16, 128>}, {pipeline_mode = #tpu.pipeline_mode<synchronous>, transform_indices = @transform_2, window_bounds = array<i64: 1, 128>}, {transform_indices = @transform_3, window_bounds = array<i64: 64, 128>}]} {
    %c0 = arith.constant 0 : index
    %c0_0 = arith.constant 0 : index
    %0 = vector.load %arg1[%c0, %c0_0] : memref<64x16xf32, #tpu.memory_space<vmem>>, vector<64x16xf32>
    %c0_1 = arith.constant 0 : index
    %c0_2 = arith.constant 0 : index
    %1 = vector.load %arg2[%c0_1, %c0_2] : memref<16x128xf32, #tpu.memory_space<vmem>>, vector<16x128xf32>
    %cst = arith.constant dense<0.000000e+00> : vector<64x128xf32>
    %2 = tpu.matmul %0, %1, %cst {dimension_numbers = #tpu.dot_dimension_numbers<[1], [0], [0], [1], [0, 0, 1, 1], [], []>} : vector<64x16xf32>, vector<16x128xf32>, vector<64x128xf32> -> vector<64x128xf32>
    %c0_3 = arith.constant 0 : index
    %c0_4 = arith.constant 0 : index
    %3 = vector.load %arg3[%c0_3, %c0_4] : memref<1x128xf32, #tpu.memory_space<vmem>>, vector<1x128xf32>
    %4 = vector.broadcast %3 : vector<1x128xf32> to vector<64x128xf32>
    %5 = arith.addf %2, %4 : vector<64x128xf32>
    %c0_5 = arith.constant 0 : index
    %c0_6 = arith.constant 0 : index
    %6 = vector.load %arg4[%c0_5, %c0_6] : memref<64x128xf32, #tpu.memory_space<vmem>>, vector<64x128xf32>
    tpu.vector_store %arg4[%c0_5, %c0_6], %5 {strides = array<i32>} : memref<64x128xf32, #tpu.memory_space<vmem>>, vector<64x128xf32>,
    return
  }
  func.func @transform_0(%arg0: i32) -> (i32, i32) {
    %c0_i32 = arith.constant 0 : i32
    %c0_i32_0 = arith.constant 0 : i32
    return %arg0, %c0_i32 : i32, i32
  }
  func.func @transform_1(%arg0: i32) -> (i32, i32) {
    %c0_i32 = arith.constant 0 : i32
    %c0_i32_0 = arith.constant 0 : i32
    %c0_i32_1 = arith.constant 0 : i32
    return %c0_i32, %c0_i32_0 : i32, i32
  }
  func.func @transform_2(%arg0: i32) -> (i32, i32) {
    %c0_i32 = arith.constant 0 : i32
    %c0_i32_0 = arith.constant 0 : i32
    %c0_i32_1 = arith.constant 0 : i32
    return %c0_i32, %c0_i32_0 : i32, i32
  }
  func.func @transform_3(%arg0: i32) -> (i32, i32) {
    %c0_i32 = arith.constant 0 : i32
    %c0_i32_0 = arith.constant 0 : i32
    return %arg0, %c0_i32 : i32, i32
  }
}

</mosaic_0001>

<llo_original>
// kernel: tpu_custom_call.1
$region0: #{tpu_custom_call.1}
  #allocation0 [shape = 'u32[]', space=smem, size = 0x4, offset = 0x4, fixed_abs, tag = 'smem constant byte address 0x4 - core index']
  #allocation1 [shape = 'u32[144,128]{1,0:T(1,128)}', space=vmem, size = 0x12000, scoped, tag = 'internal scratch']
  %s0 = inlined_call_operand.vmem [shape: f32[64,16], index: 0, kind: input, shape index: {}]
  %s1 = inlined_call_operand.vmem [shape: f32[16,128], index: 1, kind: input, shape index: {}]
  %s2 = inlined_call_operand.vmem [shape: f32[1,128], index: 2, kind: input, shape index: {}]
  %s3 = inlined_call_operand.hbm [shape: f32[64,128], index: 3, kind: output, shape index: {}]
  %s4 = sld [smem:[#allocation0]]
  $region22: #{tpu_custom_call.1} parent=0
    _
  %s6 = ssub.s32 1, %s4
  %s7 = scalar_select 0, %s6, %s4
  $region1: #{tpu_custom_call.1} parent=0
    #allocation2 [shape = 'u8[32768]{0}', space=vmem, size = 0x8000, scoped, tag = 'output window, operand 0, single buffered']
    #allocation3 [shape = 's32[1]{0}', space=sflag, size = 0x4, scoped, tag = 'scoped memory for tpu_custom_call.1']
    %8 = vsyncpa [#allocation3], 0
    // Predicated region
    $region2: #{tpu_custom_call.1} parent=1 // pred_check
      _
    $region3: #{tpu_custom_call.1} parent=1 // pred_check_branch
      %10 = sbr.rel (0) target = $region5
    $region4: #{tpu_custom_call.1} parent=1 // pred_region
      _
    $region5: #{tpu_custom_call.1} parent=1 // pred_fallthru
      _
    // Predicated region
    $region6: #{tpu_custom_call.1} parent=1 // pred_check
      _
    $region7: #{tpu_custom_call.1} parent=1 // pred_check_branch
      %12 = sbr.rel (0) target = $region9
    $region8: #{tpu_custom_call.1} parent=1 // pred_region
      _
    $region9: #{tpu_custom_call.1} parent=1 // pred_fallthru
      _
    // Predicated region
    $region10: #{tpu_custom_call.1} parent=1 // pred_check
      _
    $region11: #{tpu_custom_call.1} parent=1 // pred_check_branch
      %14 = sbr.rel (0) target = $region13
    $region12: #{tpu_custom_call.1} parent=1 // pred_region
      _
    $region13: #{tpu_custom_call.1} parent=1 // pred_fallthru
      _
    %v15 = vld [vmem:[%s0] sm:$0xff]
    %v16 = vld [vmem:[%s0 + $0x8] sm:$0xff]
    %v17 = vld [vmem:[%s0 + $0x10] sm:$0xff]
    %v18 = vld [vmem:[%s0 + $0x18] sm:$0xff]
    %v19 = vld [vmem:[%s0 + $0x20] sm:$0xff]
    %v20 = vld [vmem:[%s0 + $0x28] sm:$0xff]
    %v21 = vld [vmem:[%s0 + $0x30] sm:$0xff]
    %v22 = vld [vmem:[%s0 + $0x38] sm:$0xff]
    %v23 = vld [vmem:[%s1] sm:$0xff]
    %v24 = vld [vmem:[%s1 + $0x8] sm:$0xff]
    %v25 = vld [vmem:[%s2] sm:$0x1]
    %v27 = vlaneseq
    %v28 = vshrl.u32 %v27, 7
    %v29 = vsub.s32 0, %v28
    %v30 = vrot.slane %v25, %v29
    %vm32 = vcmask 130048
    %v34 = vsel %vm32, %v15, 0
    %v37 = vsel %vm32, %v16, 0
    %v40 = vsel %vm32, %v17, 0
    %v43 = vsel %vm32, %v18, 0
    %v46 = vsel %vm32, %v19, 0
    %v49 = vsel %vm32, %v20, 0
    %v52 = vsel %vm32, %v21, 0
    %v55 = vsel %vm32, %v22, 0
    %57 = vmatprep.subr.mxu0 0.0
    %58 = vmatpush1.msra.mxu0 0.0
    %59 = vmatprep.subr.mxu0 0.0
    %60 = vmatpush1.msra.mxu0 0.0
    %61 = vmatprep.subr.mxu0 0.0
    %62 = vmatpush1.msra.mxu0 0.0
    %63 = vmatprep.subr.mxu0 0.0
    %64 = vmatpush1.msra.mxu0 0.0
    %65 = vmatprep.subr.mxu0 0.0
    %66 = vmatpush1.msra.mxu0 0.0
    %67 = vmatprep.subr.mxu0 0.0
    %68 = vmatpush1.msra.mxu0 0.0
    %69 = vmatprep.subr.mxu0 0.0
    %70 = vmatpush1.msra.mxu0 0.0
    %71 = vmatprep.subr.mxu0 0.0
    %72 = vmatpush1.msra.mxu0 0.0
    %73 = vmatprep.subr.mxu0 0.0
    %74 = vmatpush1.msra.mxu0 0.0
    %75 = vmatprep.subr.mxu0 0.0
    %76 = vmatpush1.msra.mxu0 0.0
    %77 = vmatprep.subr.mxu0 0.0
    %78 = vmatpush1.msra.mxu0 0.0
    %79 = vmatprep.subr.mxu0 0.0
    %80 = vmatpush1.msra.mxu0 0.0
    %81 = vmatprep.subr.mxu0 0.0
    %82 = vmatpush1.msra.mxu0 0.0
    %83 = vmatprep.subr.mxu0 0.0
    %84 = vmatpush1.msra.mxu0 0.0
    %85 = vmatprep.subr.mxu0 0.0
    %86 = vmatpush1.msra.mxu0 %v24
    %87 = vmatprep.subr.mxu0 0.0
    %88 = vmatpush1.msra.mxu0 %v23
    %89 = vmatprep.subr.mxu0 0.0
    %90 = vmatpush2.msra.mxu0 0.0
    %91 = vmatprep.subr.mxu0 0.0
    %92 = vmatpush2.msra.mxu0 0.0
    %93 = vmatprep.subr.mxu0 0.0
    %94 = vmatpush2.msra.mxu0 0.0
    %95 = vmatprep.subr.mxu0 0.0
    %96 = vmatpush2.msra.mxu0 0.0
    %97 = vmatprep.subr.mxu0 0.0
    %98 = vmatpush2.msra.mxu0 0.0
    %99 = vmatprep.subr.mxu0 0.0
    %100 = vmatpush2.msra.mxu0 0.0
    %101 = vmatprep.subr.mxu0 0.0
    %102 = vmatpush2.msra.mxu0 0.0
    %103 = vmatprep.subr.mxu0 0.0
    %104 = vmatpush2.msra.mxu0 0.0
    %105 = vmatprep.subr.mxu0 0.0
    %106 = vmatpush2.msra.mxu0 0.0
    %107 = vmatprep.subr.mxu0 0.0
    %108 = vmatpush2.msra.mxu0 0.0
    %109 = vmatprep.subr.mxu0 0.0
    %110 = vmatpush2.msra.mxu0 0.0
    %111 = vmatprep.subr.mxu0 0.0
    %112 = vmatpush2.msra.mxu0 0.0
    %113 = vmatprep.subr.mxu0 0.0
    %114 = vmatpush2.msra.mxu0 0.0
    %115 = vmatprep.subr.mxu0 0.0
    %116 = vmatpush2.msra.mxu0 0.0
    %117 = vmatprep.subr.mxu0 0.0
    %118 = vmatpush2.msra.mxu0 0.0
    %119 = vmatprep.subr.mxu0 0.0
    %120 = vmatpush2.msra.mxu0 0.0
    %121 = vmatprep.mubr.f32.mxu0 0.0
    %122 = vmatmul.mubr.f32.gmra.mxu0 %v34
    %v123 = vpop.f32.mrf.mxu0
    %v124 = vadd.f32 %v30, %v123
    %v125 = vpop.f32.mrf.mxu0
    %126 = vmatprep.mubr.f32.mxu0 0.0
    %127 = vmatmul.mubr.f32.gmra.mxu0 %v37
    %v128 = vpop.f32.mrf.mxu0
    %v129 = vadd.f32 %v30, %v128
    %v130 = vpop.f32.mrf.mxu0
    %131 = vmatprep.mubr.f32.mxu0 0.0
    %132 = vmatmul.mubr.f32.gmra.mxu0 %v40
    %v133 = vpop.f32.mrf.mxu0
    %v134 = vadd.f32 %v30, %v133
    %v135 = vpop.f32.mrf.mxu0
    %136 = vmatprep.mubr.f32.mxu0 0.0
    %137 = vmatmul.mubr.f32.gmra.mxu0 %v43
    %v138 = vpop.f32.mrf.mxu0
    %v139 = vadd.f32 %v30, %v138
    %v140 = vpop.f32.mrf.mxu0
    %141 = vmatprep.mubr.f32.mxu0 0.0
    %142 = vmatmul.mubr.f32.gmra.mxu0 %v46
    %v143 = vpop.f32.mrf.mxu0
    %v144 = vadd.f32 %v30, %v143
    %v145 = vpop.f32.mrf.mxu0
    %146 = vmatprep.mubr.f32.mxu0 0.0
    %147 = vmatmul.mubr.f32.gmra.mxu0 %v49
    %v148 = vpop.f32.mrf.mxu0
    %v149 = vadd.f32 %v30, %v148
    %v150 = vpop.f32.mrf.mxu0
    %151 = vmatprep.mubr.f32.mxu0 0.0
    %152 = vmatmul.mubr.f32.gmra.mxu0 %v52
    %v153 = vpop.f32.mrf.mxu0
    %v154 = vadd.f32 %v30, %v153
    %v155 = vpop.f32.mrf.mxu0
    %156 = vmatprep.mubr.f32.mxu0 0.0
    %157 = vmatmul.mubr.f32.gmra.mxu0 %v55
    %v158 = vpop.f32.mrf.mxu0
    %v159 = vadd.f32 %v30, %v158
    %v160 = vpop.f32.mrf.mxu0
    %161 = vdwg.mxu0
    %162 = vst [vmem:[#allocation2] sm:$0xff] %v124
    %163 = vst [vmem:[#allocation2 + $0x8] sm:$0xff] %v129
    %164 = vst [vmem:[#allocation2 + $0x10] sm:$0xff] %v134
    %165 = vst [vmem:[#allocation2 + $0x18] sm:$0xff] %v139
    %166 = vst [vmem:[#allocation2 + $0x20] sm:$0xff] %v144
    %167 = vst [vmem:[#allocation2 + $0x28] sm:$0xff] %v149
    %168 = vst [vmem:[#allocation2 + $0x30] sm:$0xff] %v154
    %169 = vst [vmem:[#allocation2 + $0x38] sm:$0xff] %v159
    // Predicated region
    $region14: #{tpu_custom_call.1} parent=1 // pred_check
      _
    $region15: #{tpu_custom_call.1} parent=1 // pred_check_branch
      %171 = sbr.rel (0) target = $region17
    $region16: #{tpu_custom_call.1} parent=1 // pred_region
      %s173 = ssub.s32 1024, 1024
      %174 = vsyncadd [#allocation3], %s173
      %s175 = sshll.u32 [#allocation2], 4
      %s176 = int_to_ptr.vmem [resolvable:$true] %s175
      %181 = dma.vmem_to_hbm [thread:$0]  %s176, 1024, %s3, [#allocation3], 128, 128, 8
    $region17: #{tpu_custom_call.1} parent=1 // pred_fallthru
      _
    // Predicated region
    $region18: #{tpu_custom_call.1} parent=1 // pred_check
      _
    $region19: #{tpu_custom_call.1} parent=1 // pred_check_branch
      %183 = sbr.rel (0) target = $region21
    $region20: #{tpu_custom_call.1} parent=1 // pred_region
      %184 = dma.done [#allocation3], 1024
    $region21: #{tpu_custom_call.1} parent=1 // pred_fallthru
      _
    %185 = vsyncpa [#allocation3], 1

</llo_original>
